<compile_context>
chip_gen: v7x
topology: tpu7x:2x2x1
jax: 0.10.0
libtpu: 0.0.40
codegen_flags: <defaults>
</compile_context>

<pallas_src>
import math

import jax
import jax.numpy as jnp
from jax.experimental import pallas as pl
from jax.experimental.pallas import tpu as pltpu

HIDDEN = 128
TILE_B_MAX = 2048          # rows per grid step; working set is a few MiB, far
                           # under VMEM on every generation (incl. v7x 64 MiB)
SINGLE_TILE_B = 256        # below this, one grid step (splitting isn't worth it)


def _round_up(x, m):
    return ((x + m - 1) // m) * m


def _pick_tile_b(batch):
    """Batch tile: full-extent for small B; otherwise a 128-multiple sized so
    the grid has >=2 steps (v7x megacore) and at most TILE_B_MAX rows."""
    if batch <= SINGLE_TILE_B:
        return batch
    half = pl.cdiv(batch, 2)
    return min(TILE_B_MAX, _round_up(half, 128))


def critic_mlp_kernel(s_ref, a_ref, w1s_ref, w1a_ref, b1_ref,
                      w2_ref, b2_ref, w3_ref, b3_ref, o_ref):
    """Fused 3-layer MLP on one batch tile.

    h1 = relu(state @ W1_s + action @ W1_a + b1)   (bf16 operands, f32 acc)
    h2 = relu(h1 @ W2 + b2)                        (bf16 operands, f32 acc)
    out = sum(h2 * w3, axis=-1) + b3               (VPU mul + lane reduce)
    The (tile_b, 1) result is transposed to (1, tile_b) for a lane-dense store.
    """
    # Layer 1 (concat fused via split W1); inputs arrive as bf16.
    h1 = (jnp.dot(s_ref[...], w1s_ref[...], preferred_element_type=jnp.float32)
          + jnp.dot(a_ref[...], w1a_ref[...], preferred_element_type=jnp.float32)
          + b1_ref[...])
    h1 = jnp.maximum(h1, 0.0).astype(jnp.bfloat16)

    # Layer 2.
    h2 = jnp.dot(h1, w2_ref[...], preferred_element_type=jnp.float32) + b2_ref[...]
    h2 = jnp.maximum(h2, 0.0)

    # Layer 3: 128 -> 1.  VPU multiply + lane reduction (avoid N=1 MXU matmul),
    # then transpose the skinny column to a lane-dense row before storing.
    q = jnp.sum(h2 * w3_ref[...], axis=-1, keepdims=True) + b3_ref[...]  # (tile_b, 1)
    o_ref[...] = jnp.transpose(q)                                        # (1, tile_b)


def prepare_critic_params(params):
    """One-time conversion of raw params into the kernel's layout.

    Split W1 for the fused concat, cast matmul weights to bf16, lay w3 out as a
    (1, 128) row, biases as (1, N) f32.  Call once and reuse across calls.
    """
    w1, b1, w2, b2, w3, b3 = params
    input_dim = w1.shape[0]
    state_dim = input_dim - HIDDEN if False else None  # placeholder, set below
    # state_dim is recovered at call time from the state tensor; here we only
    # need the full (input_dim, HIDDEN) matrix split lazily.  To keep the split
    # hoisted, we require it now:
    raise_if = None
    del state_dim, raise_if
    return {
        "w1": jnp.asarray(w1, jnp.bfloat16),                 # (input_dim, 128)
        "b1": jnp.asarray(b1, jnp.float32).reshape(1, HIDDEN),
        "w2": jnp.asarray(w2, jnp.bfloat16),                 # (128, 128)
        "b2": jnp.asarray(b2, jnp.float32).reshape(1, HIDDEN),
        "w3": jnp.asarray(w3, jnp.float32).reshape(1, HIDDEN),
        "b3": jnp.asarray(b3, jnp.float32).reshape(1, 1),
        "input_dim": int(w1.shape[0]),
    }


def split_w1(prepared, state_dim):
    """Split the bf16 W1 into (W1_state, W1_action); do this once per
    (state_dim) configuration and cache alongside the prepared params."""
    w1 = prepared["w1"]
    return w1[:state_dim], w1[state_dim:]


def critic_forward(state, action, prepared, w1_split=None):
    """state: (B, state_dim), action: (B, action_dim) -> (B, 1) float32.

    `prepared` comes from prepare_critic_params(); `w1_split` (optional) from
    split_w1() — pass it to avoid the per-call slice at tiny batch sizes.
    """
    B, state_dim = state.shape
    action_dim = action.shape[1]
    input_dim = state_dim + action_dim
    assert input_dim == prepared["input_dim"], (input_dim, prepared["input_dim"])

    # bf16 activations (no-op if callers already supply bf16).
    state = state.astype(jnp.bfloat16)
    action = action.astype(jnp.bfloat16)

    if w1_split is None:
        w1_split = split_w1(prepared, state_dim)
    w1s, w1a = w1_split
    b1f, w2b, b2f, w3r, b3f = (prepared["b1"], prepared["w2"], prepared["b2"],
                               prepared["w3"], prepared["b3"])

    tile_b = _pick_tile_b(B)
    grid = (pl.cdiv(B, tile_b),)

    act_spec = lambda cols: pl.BlockSpec((tile_b, cols), lambda i: (i, 0))
    const = lambda shape: pl.BlockSpec(shape, lambda i: (0, 0))

    # Advisory cost estimate (bf16 activations / matmul weights, f32 output).
    flops = 2 * B * (input_dim * HIDDEN + HIDDEN * HIDDEN + HIDDEN)
    weight_bytes = (input_dim * HIDDEN + HIDDEN * HIDDEN) * 2 \
        + (HIDDEN + HIDDEN + HIDDEN + 1) * 4
    bytes_accessed = B * input_dim * 2 + B * 4 + weight_bytes
    cost = pl.CostEstimate(flops=flops, transcendentals=0,
                           bytes_accessed=bytes_accessed)

    out_t = pl.pallas_call(
        critic_mlp_kernel,
        out_shape=jax.ShapeDtypeStruct((1, B), jnp.float32),
        grid=grid,
        in_specs=[
            act_spec(state_dim),              # state  (bf16)
            act_spec(action_dim),             # action (bf16)
            const((state_dim, HIDDEN)),       # W1_s   (bf16)
            const((action_dim, HIDDEN)),      # W1_a   (bf16)
            const((1, HIDDEN)),               # b1     (f32)
            const((HIDDEN, HIDDEN)),          # W2     (bf16)
            const((1, HIDDEN)),               # b2     (f32)
            const((1, HIDDEN)),               # w3 row (f32)
            const((1, 1)),                    # b3     (f32)
        ],
        # Lane-dense output: (1, tile_b) blocks into a (1, B) slab.
        out_specs=pl.BlockSpec((1, tile_b), lambda i: (0, i)),
        compiler_params=pltpu.CompilerParams(
            dimension_semantics=("parallel",)),
        cost_estimate=cost,
    )(state, action, w1s, w1a, b1f, w2b, b2f, w3r, b3f)

    return out_t.reshape(B, 1)


def init_critic_params(key, input_dim, hidden=HIDDEN, weight_init=0.003):
    """Deterministic init mirroring the PyTorch module.

    Hidden layers use the default nn.Linear init U(-1/sqrt(fan_in), 1/sqrt(fan_in));
    the output layer uses U(-weight_init, weight_init).
    Weights are stored as (in_features, out_features).
    """
    k1, k2, k3, k4, k5, k6 = jax.random.split(key, 6)

    bound1 = 1.0 / math.sqrt(input_dim)
    w1 = jax.random.uniform(k1, (input_dim, hidden), jnp.float32, -bound1, bound1)
    b1 = jax.random.uniform(k2, (1, hidden), jnp.float32, -bound1, bound1)

    bound2 = 1.0 / math.sqrt(hidden)
    w2 = jax.random.uniform(k3, (hidden, hidden), jnp.float32, -bound2, bound2)
    b2 = jax.random.uniform(k4, (1, hidden), jnp.float32, -bound2, bound2)

    w3 = jax.random.uniform(k5, (hidden, 1), jnp.float32, -weight_init, weight_init)
    b3 = jax.random.uniform(k6, (1, 1), jnp.float32, -weight_init, weight_init)

    return (w1, b1, w2, b2, w3, b3)


def critic_reference(state, action, params, *, bf16_operands=True):
    """Pure-JAX reference (optionally with the same bf16-operand casts)."""
    w1, b1, w2, b2, w3, b3 = params
    x = jnp.concatenate([state, action], axis=-1).astype(jnp.float32)
    if bf16_operands:
        h1 = jnp.dot(x.astype(jnp.bfloat16), w1.astype(jnp.bfloat16),
                     preferred_element_type=jnp.float32) + b1
        h1 = jnp.maximum(h1, 0.0)
        h2 = jnp.dot(h1.astype(jnp.bfloat16), w2.astype(jnp.bfloat16),
                     preferred_element_type=jnp.float32) + b2
        h2 = jnp.maximum(h2, 0.0)
    else:
        h1 = jnp.maximum(x @ w1 + b1, 0.0)
        h2 = jnp.maximum(h1 @ w2 + b2, 0.0)
    return h2 @ w3 + b3


if __name__ == "__main__":
    key = jax.random.PRNGKey(0)
    k_state, k_action, k_params, k_state2, k_action2 = jax.random.split(key, 5)

    state_dim = 24
    action_dim = 8
    input_dim = state_dim + action_dim  # 32

    params = init_critic_params(k_params, input_dim)
    prepared = prepare_critic_params(params)
    w1_split = split_w1(prepared, state_dim)   # hoisted out of the per-call path

    # --- small batch (single grid step) ---
    B = 8
    state = jax.random.normal(k_state, (B, state_dim), jnp.float32)
    action = jax.random.normal(k_action, (B, action_dim), jnp.float32)

    out = critic_forward(state, action, prepared, w1_split)
    out = jax.block_until_ready(out)
    assert out.shape == (B, 1), out.shape

    ref_bf16 = critic_reference(state, action, params, bf16_operands=True)
    assert jnp.allclose(out, ref_bf16, atol=2e-3, rtol=2e-2), (out, ref_bf16)
    ref_f32 = critic_reference(state, action, params, bf16_operands=False)
    assert jnp.allclose(out, ref_f32, atol=2e-2, rtol=2e-1), (out, ref_f32)

    # --- larger batch (multi-step grid, partial last tile, lane-dense store) ---
    B2 = 384
    state2 = jax.random.normal(k_state2, (B2, state_dim), jnp.float32)
    action2 = jax.random.normal(k_action2, (B2, action_dim), jnp.float32)

    out2 = critic_forward(state2, action2, prepared, w1_split)
    out2 = jax.block_until_ready(out2)
    assert out2.shape == (B2, 1), out2.shape

    ref2 = critic_reference(state2, action2, params, bf16_operands=True)
    assert jnp.allclose(out2, ref2, atol=2e-3, rtol=2e-2), (
        jnp.max(jnp.abs(out2 - ref2)))

    print("KERNEL_OK")
</pallas_src>

<mosaic_0001>
module attributes {stable_mosaic.version = 11 : i64} {
  func.func @critic_mlp_kernel(%arg0: i32, %arg1: memref<8x24xbf16, #tpu.memory_space<vmem>>, %arg2: memref<8x8xbf16, #tpu.memory_space<vmem>>, %arg3: memref<24x128xbf16, #tpu.memory_space<vmem>>, %arg4: memref<8x128xbf16, #tpu.memory_space<vmem>>, %arg5: memref<1x128xf32, #tpu.memory_space<vmem>>, %arg6: memref<128x128xbf16, #tpu.memory_space<vmem>>, %arg7: memref<1x128xf32, #tpu.memory_space<vmem>>, %arg8: memref<1x128xf32, #tpu.memory_space<vmem>>, %arg9: memref<1x1xf32, #tpu.memory_space<vmem>>, %arg10: memref<1x8xf32, #tpu.memory_space<vmem>>) attributes {dimension_semantics = [#tpu.dimension_semantics<parallel>], iteration_bounds = array<i64: 1>, scalar_prefetch = 0 : i64, scratch_operands = 0 : i64, tpu.core_type = #tpu.core_type<tc>, window_params = [{transform_indices = @transform_0, window_bounds = array<i64: 8, 24>}, {transform_indices = @transform_1, window_bounds = array<i64: 8, 8>}, {pipeline_mode = #tpu.pipeline_mode<synchronous>, transform_indices = @transform_2, window_bounds = array<i64: 24, 128>}, {pipeline_mode = #tpu.pipeline_mode<synchronous>, transform_indices = @transform_3, window_bounds = array<i64: 8, 128>}, {pipeline_mode = #tpu.pipeline_mode<synchronous>, transform_indices = @transform_4, window_bounds = array<i64: 1, 128>}, {pipeline_mode = #tpu.pipeline_mode<synchronous>, transform_indices = @transform_5, window_bounds = array<i64: 128, 128>}, {pipeline_mode = #tpu.pipeline_mode<synchronous>, transform_indices = @transform_6, window_bounds = array<i64: 1, 128>}, {pipeline_mode = #tpu.pipeline_mode<synchronous>, transform_indices = @transform_7, window_bounds = array<i64: 1, 128>}, {pipeline_mode = #tpu.pipeline_mode<synchronous>, transform_indices = @transform_8, window_bounds = array<i64: 1, 1>}, {transform_indices = @transform_9, window_bounds = array<i64: 1, 8>}]} {
    %c0 = arith.constant 0 : index
    %c0_0 = arith.constant 0 : index
    %0 = vector.load %arg1[%c0, %c0_0] : memref<8x24xbf16, #tpu.memory_space<vmem>>, vector<8x24xbf16>
    %c0_1 = arith.constant 0 : index
    %c0_2 = arith.constant 0 : index
    %1 = vector.load %arg3[%c0_1, %c0_2] : memref<24x128xbf16, #tpu.memory_space<vmem>>, vector<24x128xbf16>
    %cst = arith.constant dense<0.000000e+00> : vector<8x128xf32>
    %2 = tpu.matmul %0, %1, %cst {dimension_numbers = #tpu.dot_dimension_numbers<[1], [0], [0], [1], [0, 0, 1, 1], [], []>} : vector<8x24xbf16>, vector<24x128xbf16>, vector<8x128xf32> -> vector<8x128xf32>
    %c0_3 = arith.constant 0 : index
    %c0_4 = arith.constant 0 : index
    %3 = vector.load %arg2[%c0_3, %c0_4] : memref<8x8xbf16, #tpu.memory_space<vmem>>, vector<8x8xbf16>
    %c0_5 = arith.constant 0 : index
    %c0_6 = arith.constant 0 : index
    %4 = vector.load %arg4[%c0_5, %c0_6] : memref<8x128xbf16, #tpu.memory_space<vmem>>, vector<8x128xbf16>
    %cst_7 = arith.constant dense<0.000000e+00> : vector<8x128xf32>
    %5 = tpu.matmul %3, %4, %cst_7 {dimension_numbers = #tpu.dot_dimension_numbers<[1], [0], [0], [1], [0, 0, 1, 1], [], []>} : vector<8x8xbf16>, vector<8x128xbf16>, vector<8x128xf32> -> vector<8x128xf32>
    %6 = arith.addf %2, %5 : vector<8x128xf32>
    %c0_8 = arith.constant 0 : index
    %c0_9 = arith.constant 0 : index
    %7 = vector.load %arg5[%c0_8, %c0_9] : memref<1x128xf32, #tpu.memory_space<vmem>>, vector<1x128xf32>
    %8 = vector.broadcast %7 : vector<1x128xf32> to vector<8x128xf32>
    %9 = arith.addf %6, %8 : vector<8x128xf32>
    %cst_10 = arith.constant 0.000000e+00 : f32
    %10 = vector.broadcast %cst_10 : f32 to vector<8x128xf32>
    %11 = arith.maximumf %9, %10 : vector<8x128xf32>
    %12 = arith.truncf %11 : vector<8x128xf32> to vector<8x128xbf16>
    %c0_11 = arith.constant 0 : index
    %c0_12 = arith.constant 0 : index
    %13 = vector.load %arg6[%c0_11, %c0_12] : memref<128x128xbf16, #tpu.memory_space<vmem>>, vector<128x128xbf16>
    %cst_13 = arith.constant dense<0.000000e+00> : vector<8x128xf32>
    %14 = tpu.matmul %12, %13, %cst_13 {dimension_numbers = #tpu.dot_dimension_numbers<[1], [0], [0], [1], [0, 0, 1, 1], [], []>} : vector<8x128xbf16>, vector<128x128xbf16>, vector<8x128xf32> -> vector<8x128xf32>
    %c0_14 = arith.constant 0 : index
    %c0_15 = arith.constant 0 : index
    %15 = vector.load %arg7[%c0_14, %c0_15] : memref<1x128xf32, #tpu.memory_space<vmem>>, vector<1x128xf32>
    %16 = vector.broadcast %15 : vector<1x128xf32> to vector<8x128xf32>
    %17 = arith.addf %14, %16 : vector<8x128xf32>
    %cst_16 = arith.constant 0.000000e+00 : f32
    %18 = vector.broadcast %cst_16 : f32 to vector<8x128xf32>
    %19 = arith.maximumf %17, %18 : vector<8x128xf32>
    %c0_17 = arith.constant 0 : index
    %c0_18 = arith.constant 0 : index
    %20 = vector.load %arg8[%c0_17, %c0_18] : memref<1x128xf32, #tpu.memory_space<vmem>>, vector<1x128xf32>
    %21 = vector.broadcast %20 : vector<1x128xf32> to vector<8x128xf32>
    %22 = arith.mulf %19, %21 : vector<8x128xf32>
    %cst_19 = arith.constant dense<0.000000e+00> : vector<8xf32>
    %23 = vector.multi_reduction <add>, %22, %cst_19 [1] : vector<8x128xf32> to vector<8xf32>
    %24 = vector.shape_cast %23 : vector<8xf32> to vector<8x1xf32>
    %c0_20 = arith.constant 0 : index
    %c0_21 = arith.constant 0 : index
    %25 = vector.load %arg9[%c0_20, %c0_21] : memref<1x1xf32, #tpu.memory_space<vmem>>, vector<1x1xf32>
    %26 = vector.broadcast %25 : vector<1x1xf32> to vector<8x1xf32>
    %27 = arith.addf %24, %26 : vector<8x1xf32>
    %28 = tpu.transpose %27, [1, 0] : vector<8x1xf32> -> vector<1x8xf32>
    %c0_22 = arith.constant 0 : index
    %c0_23 = arith.constant 0 : index
    %29 = vector.load %arg10[%c0_22, %c0_23] : memref<1x8xf32, #tpu.memory_space<vmem>>, vector<1x8xf32>
    tpu.vector_store %arg10[%c0_22, %c0_23], %28 {strides = array<i32>} : memref<1x8xf32, #tpu.memory_space<vmem>>, vector<1x8xf32>,
    return
  }
  func.func @transform_0(%arg0: i32) -> (i32, i32) {
    %c0_i32 = arith.constant 0 : i32
    %c0_i32_0 = arith.constant 0 : i32
    return %arg0, %c0_i32 : i32, i32
  }
  func.func @transform_1(%arg0: i32) -> (i32, i32) {
    %c0_i32 = arith.constant 0 : i32
    %c0_i32_0 = arith.constant 0 : i32
    return %arg0, %c0_i32 : i32, i32
  }
  func.func @transform_2(%arg0: i32) -> (i32, i32) {
    %c0_i32 = arith.constant 0 : i32
    %c0_i32_0 = arith.constant 0 : i32
    %c0_i32_1 = arith.constant 0 : i32
    return %c0_i32, %c0_i32_0 : i32, i32
  }
  func.func @transform_3(%arg0: i32) -> (i32, i32) {
    %c0_i32 = arith.constant 0 : i32
    %c0_i32_0 = arith.constant 0 : i32
    %c0_i32_1 = arith.constant 0 : i32
    return %c0_i32, %c0_i32_0 : i32, i32
  }
  func.func @transform_4(%arg0: i32) -> (i32, i32) {
    %c0_i32 = arith.constant 0 : i32
    %c0_i32_0 = arith.constant 0 : i32
    %c0_i32_1 = arith.constant 0 : i32
    return %c0_i32, %c0_i32_0 : i32, i32
  }
  func.func @transform_5(%arg0: i32) -> (i32, i32) {
    %c0_i32 = arith.constant 0 : i32
    %c0_i32_0 = arith.constant 0 : i32
    %c0_i32_1 = arith.constant 0 : i32
    return %c0_i32, %c0_i32_0 : i32, i32
  }
  func.func @transform_6(%arg0: i32) -> (i32, i32) {
    %c0_i32 = arith.constant 0 : i32
    %c0_i32_0 = arith.constant 0 : i32
    %c0_i32_1 = arith.constant 0 : i32
    return %c0_i32, %c0_i32_0 : i32, i32
  }
  func.func @transform_7(%arg0: i32) -> (i32, i32) {
    %c0_i32 = arith.constant 0 : i32
    %c0_i32_0 = arith.constant 0 : i32
    %c0_i32_1 = arith.constant 0 : i32
    return %c0_i32, %c0_i32_0 : i32, i32
  }
  func.func @transform_8(%arg0: i32) -> (i32, i32) {
    %c0_i32 = arith.constant 0 : i32
    %c0_i32_0 = arith.constant 0 : i32
    %c0_i32_1 = arith.constant 0 : i32
    return %c0_i32, %c0_i32_0 : i32, i32
  }
  func.func @transform_9(%arg0: i32) -> (i32, i32) {
    %c0_i32 = arith.constant 0 : i32
    %c0_i32_0 = arith.constant 0 : i32
    return %c0_i32, %arg0 : i32, i32
  }
}

</mosaic_0001>

<llo_original>
// kernel: tpu_custom_call.1
$region0: #{tpu_custom_call.1}
  #allocation0 [shape = 'u32[]', space=smem, size = 0x4, offset = 0x4, fixed_abs, tag = 'smem constant byte address 0x4 - core index']
  #allocation1 [shape = 'u32[144,128]{1,0:T(1,128)}', space=vmem, size = 0x12000, scoped, tag = 'internal scratch']
  #allocation2 [shape = 'f32[1,1]{1,0:T(1,128)S(1)}', space=vmem, size = 0x200, scoped, tag = 'scoped memory for tpu_custom_call.1']
  %s0 = inlined_call_operand.hbm [shape: bf16[8,24], index: 0, kind: input, shape index: {}]
  %s1 = inlined_call_operand.vmem [shape: bf16[8,8], index: 1, kind: input, shape index: {}]
  %s2 = inlined_call_operand.hbm [shape: bf16[24,128], index: 2, kind: input, shape index: {}]
  %s3 = inlined_call_operand.vmem [shape: bf16[8,128], index: 3, kind: input, shape index: {}]
  %s4 = inlined_call_operand.vmem [shape: f32[1,128], index: 4, kind: input, shape index: {}]
  %s5 = inlined_call_operand.hbm [shape: bf16[128,128], index: 5, kind: input, shape index: {}]
  %s6 = inlined_call_operand.vmem [shape: f32[1,128], index: 6, kind: input, shape index: {}]
  %s7 = inlined_call_operand.vmem [shape: f32[1,128], index: 7, kind: input, shape index: {}]
  %s8 = inlined_call_operand.<no memory space> [shape: f32[1,1], index: 8, kind: input, shape index: {}]
  %s9 = inlined_call_operand.hbm [shape: f32[1,8], index: 9, kind: output, shape index: {}]
  %s10 = sld [smem:[#allocation0]]
  $region58: #{tpu_custom_call.1} parent=0
    _
  %s12 = ssub.s32 1, %s10
  %s13 = scalar_select 0, %s12, %s10
  %v14 = vstv %s8
  %15 = vst [vmem:[#allocation2] sm:$0x1] %v14
  $region1: #{tpu_custom_call.1} parent=0
    #allocation3 [shape = 'u8[2048]{0}', space=vmem, size = 0x800, scoped, tag = 'input window, operand 0, single buffered']
    #allocation4 [shape = 's32[1]{0}', space=sflag, size = 0x4, scoped, tag = 'scoped memory for tpu_custom_call.1']
    #allocation5 [shape = 's32[1]{0}', space=sflag, size = 0x4, scoped, tag = 'scoped memory for tpu_custom_call.1']
    #allocation6 [shape = 'u8[6144]{0}', space=vmem, size = 0x1800, scoped, tag = 'input window, operand 2, single buffered']
    #allocation7 [shape = 's32[1]{0}', space=sflag, size = 0x4, scoped, tag = 'scoped memory for tpu_custom_call.1']
    #allocation8 [shape = 'u8[32768]{0}', space=vmem, size = 0x8000, scoped, tag = 'input window, operand 5, single buffered']
    #allocation9 [shape = 'u8[512]{0}', space=vmem, size = 0x400, scoped, tag = 'output window, operand 0, single buffered']
    %16 = vsyncpa [#allocation4], 0
    %17 = vsyncpa [#allocation7], 0
    %18 = vsyncpa [#allocation5], 0
    // Predicated region
    $region2: #{tpu_custom_call.1} parent=1 // pred_check
      _
    $region3: #{tpu_custom_call.1} parent=1 // pred_check_branch
      %20 = sbr.rel (0) target = $region5
    $region4: #{tpu_custom_call.1} parent=1 // pred_region
      %s22 = ssub.s32 64, 64
      %23 = vsyncadd [#allocation4], %s22
      %s25 = sshll.u32 [#allocation3], 4
      %s26 = int_to_ptr.vmem [resolvable:$true] %s25
      %28 = dma.hbm_to_vmem [thread:$0]  %s0, 64, %s26, [#allocation4]
    $region5: #{tpu_custom_call.1} parent=1 // pred_fallthru
      _
    // Predicated region
    $region6: #{tpu_custom_call.1} parent=1 // pred_check
      _
    $region7: #{tpu_custom_call.1} parent=1 // pred_check_branch
      %30 = sbr.rel (0) target = $region9
    $region8: #{tpu_custom_call.1} parent=1 // pred_region
      _
    $region9: #{tpu_custom_call.1} parent=1 // pred_fallthru
      _
    // Predicated region
    $region10: #{tpu_custom_call.1} parent=1 // pred_check
      _
    $region11: #{tpu_custom_call.1} parent=1 // pred_check_branch
      %32 = sbr.rel (0) target = $region13
    $region12: #{tpu_custom_call.1} parent=1 // pred_region
      %s34 = ssub.s32 192, 192
      %35 = vsyncadd [#allocation7], %s34
      %s36 = sshll.u32 [#allocation6], 4
      %s37 = int_to_ptr.vmem [resolvable:$true] %s36
      %42 = dma.hbm_to_vmem [thread:$0]  %s2, 192, %s37, [#allocation7], 64, 64, 4
    $region13: #{tpu_custom_call.1} parent=1 // pred_fallthru
      _
    // Predicated region
    $region14: #{tpu_custom_call.1} parent=1 // pred_check
      _
    $region15: #{tpu_custom_call.1} parent=1 // pred_check_branch
      %44 = sbr.rel (0) target = $region17
    $region16: #{tpu_custom_call.1} parent=1 // pred_region
      _
    $region17: #{tpu_custom_call.1} parent=1 // pred_fallthru
      _
    // Predicated region
    $region18: #{tpu_custom_call.1} parent=1 // pred_check
      _
    $region19: #{tpu_custom_call.1} parent=1 // pred_check_branch
      %46 = sbr.rel (0) target = $region21
    $region20: #{tpu_custom_call.1} parent=1 // pred_region
      _
    $region21: #{tpu_custom_call.1} parent=1 // pred_fallthru
      _
    // Predicated region
    $region22: #{tpu_custom_call.1} parent=1 // pred_check
      _
    $region23: #{tpu_custom_call.1} parent=1 // pred_check_branch
      %48 = sbr.rel (0) target = $region25
    $region24: #{tpu_custom_call.1} parent=1 // pred_region
      %s50 = ssub.s32 1024, 1024
      %51 = vsyncadd [#allocation7], %s50
      %s52 = sshll.u32 [#allocation8], 4
      %s53 = int_to_ptr.vmem [resolvable:$true] %s52
      %58 = dma.hbm_to_vmem [thread:$0]  %s5, 1024, %s53, [#allocation7], 64, 64, 4
    $region25: #{tpu_custom_call.1} parent=1 // pred_fallthru
      _
    // Predicated region
    $region26: #{tpu_custom_call.1} parent=1 // pred_check
      _
    $region27: #{tpu_custom_call.1} parent=1 // pred_check_branch
      %60 = sbr.rel (0) target = $region29
    $region28: #{tpu_custom_call.1} parent=1 // pred_region
      _
    $region29: #{tpu_custom_call.1} parent=1 // pred_fallthru
      _
    // Predicated region
    $region30: #{tpu_custom_call.1} parent=1 // pred_check
      _
    $region31: #{tpu_custom_call.1} parent=1 // pred_check_branch
      %62 = sbr.rel (0) target = $region33
    $region32: #{tpu_custom_call.1} parent=1 // pred_region
      _
    $region33: #{tpu_custom_call.1} parent=1 // pred_fallthru
      _
    // Predicated region
    $region34: #{tpu_custom_call.1} parent=1 // pred_check
      _
    $region35: #{tpu_custom_call.1} parent=1 // pred_check_branch
      %64 = sbr.rel (0) target = $region37
    $region36: #{tpu_custom_call.1} parent=1 // pred_region
      _
    $region37: #{tpu_custom_call.1} parent=1 // pred_fallthru
      _
    // Predicated region
    $region38: #{tpu_custom_call.1} parent=1 // pred_check
      _
    $region39: #{tpu_custom_call.1} parent=1 // pred_check_branch
      %66 = sbr.rel (0) target = $region41
    $region40: #{tpu_custom_call.1} parent=1 // pred_region
      %67 = dma.done [#allocation4], 64
    $region41: #{tpu_custom_call.1} parent=1 // pred_fallthru
      _
    // Predicated region
    $region42: #{tpu_custom_call.1} parent=1 // pred_check
      _
    $region43: #{tpu_custom_call.1} parent=1 // pred_check_branch
      %69 = sbr.rel (0) target = $region45
    $region44: #{tpu_custom_call.1} parent=1 // pred_region
      %70 = dma.done [#allocation7], 192
    $region45: #{tpu_custom_call.1} parent=1 // pred_fallthru
      _
    // Predicated region
    $region46: #{tpu_custom_call.1} parent=1 // pred_check
      _
    $region47: #{tpu_custom_call.1} parent=1 // pred_check_branch
      %72 = sbr.rel (0) target = $region49
    $region48: #{tpu_custom_call.1} parent=1 // pred_region
      %73 = dma.done [#allocation7], 1024
    $region49: #{tpu_custom_call.1} parent=1 // pred_fallthru
      _
    %v75 = vld [vmem:[#allocation3] sm:$0xf]
    %v76 = vld [vmem:[#allocation6] sm:$0xf]
    %v77 = vld [vmem:[#allocation6 + $0x4] sm:$0xf]
    %v78 = vld [vmem:[#allocation6 + $0x8] sm:$0xf]
    %v79 = vld [vmem:[%s1] sm:$0xf]
    %v80 = vld [vmem:[%s3] sm:$0xf]
    %vm81 = vcmask 64512
    %v83 = vsel %vm81, %v79, 0
    %vm85 = vcmask 1043456
    %v87 = vsel %vm85, %v80, 0
    %89 = vmatprep.subr.bf16.mxu0 0
    %90 = vmatpush1.bf16.msra.mxu0 %v87
    %91 = vmatprep.subr.bf16.mxu0 0
    %92 = vmatpush1.bf16.msra.mxu0 0
    %93 = vmatprep.subr.bf16.mxu0 0
    %94 = vmatpush1.bf16.msra.mxu0 0
    %95 = vmatprep.subr.bf16.mxu0 0
    %96 = vmatpush1.bf16.msra.mxu0 0
    %97 = vmatprep.subr.bf16.mxu0 0
    %98 = vmatpush1.bf16.msra.mxu0 0
    %99 = vmatprep.subr.bf16.mxu0 0
    %100 = vmatpush1.bf16.msra.mxu0 0
    %101 = vmatprep.subr.bf16.mxu0 0
    %102 = vmatpush1.bf16.msra.mxu0 0
    %103 = vmatprep.subr.bf16.mxu0 0
    %104 = vmatpush1.bf16.msra.mxu0 0
    %105 = vmatprep.subr.bf16.mxu0 0
    %106 = vmatpush1.bf16.msra.mxu0 0
    %107 = vmatprep.subr.bf16.mxu0 0
    %108 = vmatpush1.bf16.msra.mxu0 0
    %109 = vmatprep.subr.bf16.mxu0 0
    %110 = vmatpush1.bf16.msra.mxu0 0
    %111 = vmatprep.subr.bf16.mxu0 0
    %112 = vmatpush1.bf16.msra.mxu0 0
    %113 = vmatprep.subr.bf16.mxu0 0
    %114 = vmatpush1.bf16.msra.mxu0 0
    %115 = vmatprep.subr.bf16.mxu0 0
    %116 = vmatpush1.bf16.msra.mxu0 0
    %117 = vmatprep.subr.bf16.mxu0 0
    %118 = vmatpush1.bf16.msra.mxu0 0
    %119 = vmatprep.subr.bf16.mxu0 0
    %120 = vmatpush1.bf16.msra.mxu0 0
    %121 = vmatprep.mubr.bf16.mxu0 0
    %122 = vmatmul.mubr.bf16.gmra.mrb[0].mxu0 %v83
    %v123 = vpop.f32.mrb[0].mxu0
    %v124 = vadd.f32 0.0, %v123
    %v125 = vpop.f32.mrb[0].mxu0
    %v126 = vpop.f32.mrb[0].mxu0
    %v127 = vpop.f32.mrb[0].mxu0
    %128 = vdwg.mxu0
    %v132 = vunpack.c.l.b16 %v76
    %v133 = vunpack.c.l.b16 %v77
    %v134 = vunpack.c.l.b16 %v78
    %v135 = vpack.c.b16 %v133, %v132
    %v136 = vpack.c.b16 %v134, %v134
    %vm138 = vcmask 195584
    %v140 = vsel %vm138, %v75, 0
    %v143 = vsel %vm85, %v136, 0
    %145 = vmatprep.subr.bf16.mxu0 0
    %146 = vmatpush1.bf16.msra.mxu0 %v135
    %147 = vmatprep.subr.bf16.mxu0 0
    %148 = vmatpush1.bf16.msra.mxu0 %v143
    %149 = vmatprep.subr.bf16.mxu0 0
    %150 = vmatpush1.bf16.msra.mxu0 0
    %151 = vmatprep.subr.bf16.mxu0 0
    %152 = vmatpush1.bf16.msra.mxu0 0
    %153 = vmatprep.subr.bf16.mxu0 0
    %154 = vmatpush1.bf16.msra.mxu0 0
    %155 = vmatprep.subr.bf16.mxu0 0
    %156 = vmatpush1.bf16.msra.mxu0 0
    %157 = vmatprep.subr.bf16.mxu0 0
    %158 = vmatpush1.bf16.msra.mxu0 0
    %159 = vmatprep.subr.bf16.mxu0 0
    %160 = vmatpush1.bf16.msra.mxu0 0
    %161 = vmatprep.subr.bf16.mxu0 0
    %162 = vmatpush1.bf16.msra.mxu0 0
    %163 = vmatprep.subr.bf16.mxu0 0
    %164 = vmatpush1.bf16.msra.mxu0 0
    %165 = vmatprep.subr.bf16.mxu0 0
    %166 = vmatpush1.bf16.msra.mxu0 0
    %167 = vmatprep.subr.bf16.mxu0 0
    %168 = vmatpush1.bf16.msra.mxu0 0
    %169 = vmatprep.subr.bf16.mxu0 0
    %170 = vmatpush1.bf16.msra.mxu0 0
    %171 = vmatprep.subr.bf16.mxu0 0
    %172 = vmatpush1.bf16.msra.mxu0 0
    %173 = vmatprep.subr.bf16.mxu0 0
    %174 = vmatpush1.bf16.msra.mxu0 0
    %175 = vmatprep.subr.bf16.mxu0 0
    %176 = vmatpush1.bf16.msra.mxu0 0
    %177 = vmatprep.mubr.bf16.mxu0 0
    %178 = vmatmul.mubr.bf16.gmra.mrb[0].mxu0 %v140
    %v179 = vpop.f32.mrb[0].mxu0
    %v180 = vadd.f32 %v124, %v179
    %v181 = vpop.f32.mrb[0].mxu0
    %v182 = vpop.f32.mrb[0].mxu0
    %v183 = vpop.f32.mrb[0].mxu0
    %184 = vdwg.mxu0
    %v185 = vld [vmem:[%s4] sm:$0x1]
    %v187 = vlaneseq
    %v188 = vshrl.u32 %v187, 7
    %v189 = vsub.s32 0, %v188
    %v190 = vrot.slane %v185, %v189
    %v192 = vadd.f32 %v180, %v190
    %v193 = vmax.f32 %v192, 0.0
    %v194 = vpack.c.bf16 %v193, %v193
    %v195 = vld [vmem:[#allocation8] sm:$0xf]
    %v196 = vld [vmem:[#allocation8 + $0x4] sm:$0xf]
    %v197 = vld [vmem:[#allocation8 + $0x8] sm:$0xf]
    %v198 = vld [vmem:[#allocation8 + $0xc] sm:$0xf]
    %v199 = vld [vmem:[#allocation8 + $0x10] sm:$0xf]
    %v200 = vld [vmem:[#allocation8 + $0x14] sm:$0xf]
    %v201 = vld [vmem:[#allocation8 + $0x18] sm:$0xf]
    %v202 = vld [vmem:[#allocation8 + $0x1c] sm:$0xf]
    %v203 = vld [vmem:[#allocation8 + $0x20] sm:$0xf]
    %v204 = vld [vmem:[#allocation8 + $0x24] sm:$0xf]
    %v205 = vld [vmem:[#allocation8 + $0x28] sm:$0xf]
    %v206 = vld [vmem:[#allocation8 + $0x2c] sm:$0xf]
    %v207 = vld [vmem:[#allocation8 + $0x30] sm:$0xf]
    %v208 = vld [vmem:[#allocation8 + $0x34] sm:$0xf]
    %v209 = vld [vmem:[#allocation8 + $0x38] sm:$0xf]
    %v210 = vld [vmem:[#allocation8 + $0x3c] sm:$0xf]
    %v211 = vld [vmem:[%s6] sm:$0x1]
    %v213 = vlaneseq
    %v214 = vshrl.u32 %v213, 7
    %v215 = vsub.s32 0, %v214
    %v216 = vrot.slane %v211, %v215
    %v234 = vunpack.c.l.b16 %v195
    %v235 = vunpack.c.l.b16 %v196
    %v236 = vunpack.c.l.b16 %v197
    %v237 = vunpack.c.l.b16 %v198
    %v238 = vunpack.c.l.b16 %v199
    %v239 = vunpack.c.l.b16 %v200
    %v240 = vunpack.c.l.b16 %v201
    %v241 = vunpack.c.l.b16 %v202
    %v242 = vunpack.c.l.b16 %v203
    %v243 = vunpack.c.l.b16 %v204
    %v244 = vunpack.c.l.b16 %v205
    %v245 = vunpack.c.l.b16 %v206
    %v246 = vunpack.c.l.b16 %v207
    %v247 = vunpack.c.l.b16 %v208
    %v248 = vunpack.c.l.b16 %v209
    %v249 = vunpack.c.l.b16 %v210
    %v250 = vpack.c.b16 %v235, %v234
    %v251 = vpack.c.b16 %v237, %v236
    %v252 = vpack.c.b16 %v239, %v238
    %v253 = vpack.c.b16 %v241, %v240
    %v254 = vpack.c.b16 %v243, %v242
    %v255 = vpack.c.b16 %v245, %v244
    %v256 = vpack.c.b16 %v247, %v246
    %v257 = vpack.c.b16 %v249, %v248
    %266 = vmatprep.subr.bf16.mxu0 0
    %267 = vmatpush1.bf16.msra.mxu0 %v250
    %268 = vmatprep.subr.bf16.mxu0 0
    %269 = vmatpush1.bf16.msra.mxu0 %v251
    %270 = vmatprep.subr.bf16.mxu0 0
    %271 = vmatpush1.bf16.msra.mxu0 %v252
    %272 = vmatprep.subr.bf16.mxu0 0
    %273 = vmatpush1.bf16.msra.mxu0 %v253
    %274 = vmatprep.subr.bf16.mxu0 0
    %275 = vmatpush1.bf16.msra.mxu0 %v254
    %276 = vmatprep.subr.bf16.mxu0 0
    %277 = vmatpush1.bf16.msra.mxu0 %v255
    %278 = vmatprep.subr.bf16.mxu0 0
    %279 = vmatpush1.bf16.msra.mxu0 %v256
    %280 = vmatprep.subr.bf16.mxu0 0
    %281 = vmatpush1.bf16.msra.mxu0 %v257
    %282 = vmatprep.subr.bf16.mxu0 0
    %283 = vmatpush1.bf16.msra.mxu0 0
    %284 = vmatprep.subr.bf16.mxu0 0
    %285 = vmatpush1.bf16.msra.mxu0 0
    %286 = vmatprep.subr.bf16.mxu0 0
    %287 = vmatpush1.bf16.msra.mxu0 0
    %288 = vmatprep.subr.bf16.mxu0 0
    %289 = vmatpush1.bf16.msra.mxu0 0
    %290 = vmatprep.subr.bf16.mxu0 0
    %291 = vmatpush1.bf16.msra.mxu0 0
    %292 = vmatprep.subr.bf16.mxu0 0
    %293 = vmatpush1.bf16.msra.mxu0 0
    %294 = vmatprep.subr.bf16.mxu0 0
    %295 = vmatpush1.bf16.msra.mxu0 0
    %296 = vmatprep.subr.bf16.mxu0 0
    %297 = vmatpush1.bf16.msra.mxu0 0
    %298 = vmatprep.mubr.bf16.mxu0 0
    %299 = vmatmul.mubr.bf16.gmra.mrb[0].mxu0 %v194
    %v300 = vpop.f32.mrb[0].mxu0
    %v301 = vadd.f32 %v216, %v300
    %v302 = vpop.f32.mrb[0].mxu0
    %v303 = vpop.f32.mrb[0].mxu0
    %v304 = vpop.f32.mrb[0].mxu0
    %305 = vdwg.mxu0
    %v306 = vmax.f32 %v301, 0.0
    %v307 = vld [vmem:[%s7] sm:$0x1]
    %v309 = vlaneseq
    %v310 = vshrl.u32 %v309, 7
    %v311 = vsub.s32 0, %v310
    %v312 = vrot.slane %v307, %v311
    %v314 = vmul.f32 %v306, %v312
    %315 = vadd.xlane.f32.xlu0 %v314
    %v316 = vpop.xlane.xlu0 %315
    %v317 = vld [vmem:[#allocation2] sm:$0x1]
    %v319 = vlaneseq
    %v320 = vshrl.u32 %v319, 7
    %v321 = vsub.s32 0, %v320
    %v322 = vrot.slane %v317, %v321
    %v324 = vadd.f32 %v316, %v322
    %325 = vxpose.xlu0.b32.start [1/16] %v324, 128
    %326 = vxpose.xlu0.b32.cont [2/16] 0.0, 128
    %327 = vxpose.xlu0.b32.cont [3/16] 0.0, 128
    %328 = vxpose.xlu0.b32.cont [4/16] 0.0, 128
    %329 = vxpose.xlu0.b32.cont [5/16] 0.0, 128
    %330 = vxpose.xlu0.b32.cont [6/16] 0.0, 128
    %331 = vxpose.xlu0.b32.cont [7/16] 0.0, 128
    %332 = vxpose.xlu0.b32.cont [8/16] 0.0, 128
    %333 = vxpose.xlu0.b32.cont [9/16] 0.0, 128
    %334 = vxpose.xlu0.b32.cont [10/16] 0.0, 128
    %335 = vxpose.xlu0.b32.cont [11/16] 0.0, 128
    %336 = vxpose.xlu0.b32.cont [12/16] 0.0, 128
    %337 = vxpose.xlu0.b32.cont [13/16] 0.0, 128
    %338 = vxpose.xlu0.b32.cont [14/16] 0.0, 128
    %339 = vxpose.xlu0.b32.cont [15/16] 0.0, 128
    %340 = vxpose.xlu0.b32.end [16/16] 0.0, 128
    %v341 = vpop.trf.xlu0
    %v342 = vpop.trf.xlu0
    %v343 = vpop.trf.xlu0
    %v344 = vpop.trf.xlu0
    %v345 = vpop.trf.xlu0
    %v346 = vpop.trf.xlu0
    %v347 = vpop.trf.xlu0
    %v348 = vpop.trf.xlu0
    %v349 = vpop.trf.xlu0
    %v350 = vpop.trf.xlu0
    %v351 = vpop.trf.xlu0
    %v352 = vpop.trf.xlu0
    %v353 = vpop.trf.xlu0
    %v354 = vpop.trf.xlu0
    %v355 = vpop.trf.xlu0
    %v356 = vpop.trf.xlu0
    %vm357 = vcmask 57344
    %358 = vst.msk [vmem:[#allocation9] sm:$0x1] %vm357, %v341
    // Predicated region
    $region50: #{tpu_custom_call.1} parent=1 // pred_check
      _
    $region51: #{tpu_custom_call.1} parent=1 // pred_check_branch
      %360 = sbr.rel (0) target = $region53
    $region52: #{tpu_custom_call.1} parent=1 // pred_region
      %s362 = ssub.s32 16, 16
      %363 = vsyncadd [#allocation5], %s362
      %s365 = sshll.u32 [#allocation9], 4
      %s366 = int_to_ptr.vmem [resolvable:$true] %s365
      %368 = dma.vmem_to_hbm [thread:$0]  %s366, 16, %s9, [#allocation5]
    $region53: #{tpu_custom_call.1} parent=1 // pred_fallthru
      _
    // Predicated region
    $region54: #{tpu_custom_call.1} parent=1 // pred_check
      _
    $region55: #{tpu_custom_call.1} parent=1 // pred_check_branch
      %370 = sbr.rel (0) target = $region57
    $region56: #{tpu_custom_call.1} parent=1 // pred_region
      %371 = dma.done [#allocation5], 16
    $region57: #{tpu_custom_call.1} parent=1 // pred_fallthru
      _
    %372 = vsyncpa [#allocation4], 1
    %373 = vsyncpa [#allocation7], 1
    %374 = vsyncpa [#allocation5], 1

</llo_original>
